<compile_context>
chip_gen: v7x
topology: tpu7x:2x2x1
jax: 0.10.0
libtpu: 0.0.40
codegen_flags: <defaults>
</compile_context>

<pallas_src>
import jax
import jax.numpy as jnp
import numpy as np
from jax import lax
from jax.experimental import pallas as pl
from jax.experimental.pallas import tpu as pltpu


def _round_up(x, m):
    return ((x + m - 1) // m) * m


def _make_kernel(H, E, L, O, S):
    EL = E + L
    ELp = _round_up(EL, 8)
    f32 = jnp.float32

    def kernel(xh_ref, enc_ref, ww_ref, wh_ref, wo_ref, b_ref,
               out_ref, hnew_ref, attnw_ref):
        # -------- unpack activations (zero-padded lanes are matched by zero weight rows)
        el = xh_ref[0:1, 0:ELp]          # (1, ELp)  [emb | nlg | 0...]
        h0 = xh_ref[1:2, 0:H]            # (1, H)
        enc = enc_ref[...]               # (S, 2H)

        # -------- GenAttn, row form: scores_i = h0 . (Wa @ enc_i + ba)
        #          = (h0 @ Wa) . enc_i + (h0 . ba)
        q = jnp.dot(h0, ww_ref[0:H, 0:2 * H], preferred_element_type=f32)      # (1, 2H)
        b_dot = jnp.sum(h0 * b_ref[0:1, 0:H], axis=-1, keepdims=True)          # (1, 1)
        # Contract last dims of q (1,2H) and enc (S,2H) -> (1,S); no transposed
        # copy of the encoder outputs is shipped or materialized.
        scores = lax.dot_general(
            q, enc, dimension_numbers=(((1,), (1,)), ((), ())),
            preferred_element_type=f32) + b_dot                                 # (1, S)

        smax = jnp.max(scores, axis=-1, keepdims=True)
        sexp = jnp.exp(scores - smax)
        denom = jnp.sum(sexp, axis=-1, keepdims=True)
        inv = pl.reciprocal(denom, approx=True)
        inv = inv * (2.0 - denom * inv)          # one Newton step -> ~f32-accurate
        attn_w = sexp * inv                      # (1, S), lane-dense
        attnw_ref[...] = attn_w

        # context = attn_weights @ encoder_outputs  -> (1, 2H)
        context = jnp.dot(attn_w, enc, preferred_element_type=f32)

        # -------- attn_combine(cat(emb, ctx, nlg)) + ReLU ; fc1 + ReLU ; fc2 + ReLU
        # (drop1 / drop2 are inference-mode identities)
        x = (jnp.dot(context, wh_ref[0:2 * H, :], preferred_element_type=f32)
             + jnp.dot(el, wh_ref[2 * H:2 * H + ELp, :], preferred_element_type=f32)
             + b_ref[1:2, 0:H])
        x = jnp.maximum(x, 0.0)
        x = jnp.maximum(
            jnp.dot(x, wh_ref[2 * H + ELp:3 * H + ELp, :], preferred_element_type=f32)
            + b_ref[2:3, 0:H], 0.0)
        x = jnp.maximum(
            jnp.dot(x, wh_ref[3 * H + ELp:4 * H + ELp, :], preferred_element_type=f32)
            + b_ref[3:4, 0:H], 0.0)

        # -------- GRU cell: 2 fused matmuls, gate order [r | z | n] in lanes
        gi = (jnp.dot(x, ww_ref[H:2 * H, 0:3 * H], preferred_element_type=f32)
              + b_ref[4:5, 0:3 * H])                                            # (1, 3H)
        gh = (jnp.dot(h0, ww_ref[2 * H:3 * H, 0:3 * H], preferred_element_type=f32)
              + b_ref[5:6, 0:3 * H])                                            # (1, 3H)
        r = jax.nn.sigmoid(gi[:, 0:H] + gh[:, 0:H])
        z = jax.nn.sigmoid(gi[:, H:2 * H] + gh[:, H:2 * H])
        n = jnp.tanh(gi[:, 2 * H:3 * H] + r * gh[:, 2 * H:3 * H])
        hnew = (1.0 - z) * n + z * h0                                           # (1, H)
        hnew_ref[...] = hnew

        # -------- out(cat(gru_out, nlg, emb)) + log_softmax
        logits = (jnp.dot(hnew, wo_ref[0:H, :], preferred_element_type=f32)
                  + jnp.dot(el, wo_ref[H:H + ELp, :], preferred_element_type=f32)
                  + b_ref[6:7, 0:O])                                            # (1, O)
        lmax = jnp.max(logits, axis=-1, keepdims=True)
        lse = jnp.log(jnp.sum(jnp.exp(logits - lmax), axis=-1, keepdims=True)) + lmax
        out_ref[...] = logits - lse

    return kernel


def pack_params(p):
    """One-time repack of raw (PyTorch-layout) parameters into lane-dense kernel slabs."""
    f32 = jnp.float32
    H = p["hidden_size"]
    E = p["embedding"].shape[1]
    O = p["out_W"].shape[0]
    L = p["comb_W"].shape[1] - E - 2 * H
    EL = E + L
    ELp = _round_up(EL, 8)

    # wide slab: attn W (un-transposed) + GRU input/hidden weights (transposed, packed gates)
    w_wide = jnp.zeros((3 * H, 3 * H), f32)
    w_wide = w_wide.at[0:H, 0:2 * H].set(p["attn_W"].astype(f32))
    w_wide = w_wide.at[H:2 * H, 0:3 * H].set(p["gru_W_ih"].T.astype(f32))
    w_wide = w_wide.at[2 * H:3 * H, 0:3 * H].set(p["gru_W_hh"].T.astype(f32))

    # H-wide slab: attn_combine (split ctx / [emb|nlg]) + fc1 + fc2, all pre-transposed
    Wc = p["comb_W"].astype(f32)                      # (H, E + 2H + L), cols [emb|ctx|nlg]
    w_h = jnp.zeros((4 * H + ELp, H), f32)
    w_h = w_h.at[0:2 * H, :].set(Wc[:, E:E + 2 * H].T)
    w_h = w_h.at[2 * H:2 * H + E, :].set(Wc[:, 0:E].T)
    w_h = w_h.at[2 * H + E:2 * H + EL, :].set(Wc[:, E + 2 * H:].T)
    w_h = w_h.at[2 * H + ELp:3 * H + ELp, :].set(p["fc1_W"].T.astype(f32))
    w_h = w_h.at[3 * H + ELp:4 * H + ELp, :].set(p["fc2_W"].T.astype(f32))

    # output slab: out Linear split hidden / [emb|nlg], pre-transposed
    Wo = p["out_W"].astype(f32)                       # (O, H + L + E), cols [h|nlg|emb]
    w_out = jnp.zeros((H + ELp, O), f32)
    w_out = w_out.at[0:H, :].set(Wo[:, 0:H].T)
    w_out = w_out.at[H:H + E, :].set(Wo[:, H + L:H + L + E].T)
    w_out = w_out.at[H + E:H + EL, :].set(Wo[:, H:H + L].T)

    # one bias matrix: one bias per row, all starting at lane 0
    BW = max(3 * H, O, H)
    bias = jnp.zeros((8, BW), f32)
    bias = bias.at[0, 0:H].set(p["attn_b"].astype(f32))
    bias = bias.at[1, 0:H].set(p["comb_b"].astype(f32))
    bias = bias.at[2, 0:H].set(p["fc1_b"].astype(f32))
    bias = bias.at[3, 0:H].set(p["fc2_b"].astype(f32))
    bias = bias.at[4, 0:3 * H].set(p["gru_b_ih"].astype(f32))
    bias = bias.at[5, 0:3 * H].set(p["gru_b_hh"].astype(f32))
    bias = bias.at[6, 0:O].set(p["out_b"].astype(f32))

    return dict(hidden_size=H, emb_dim=E, label_size=L, out_size=O,
                embedding=p["embedding"].astype(f32),
                w_wide=w_wide, w_h=w_h, w_out=w_out, bias=bias)


def attn_decoder_forward(input_idx, hidden, encoder_outputs, nlg_class, packed):
    """Mirrors AttnDecoderRNN.forward(input, hidden, encoder_outputs, nlg_class)."""
    f32 = jnp.float32
    H = packed["hidden_size"]
    E = packed["emb_dim"]
    L = packed["label_size"]
    O = packed["out_size"]
    S = int(encoder_outputs.shape[0])
    EL = E + L
    ELp = _round_up(EL, 8)
    XW = max(ELp, H)

    # glue: embedding gather + packing the three tiny row vectors into one (2, XW) slab
    emb = packed["embedding"][input_idx].reshape(E).astype(f32)
    nlg = jnp.asarray(nlg_class, f32).reshape(L)
    h0 = jnp.asarray(hidden, f32).reshape(H)
    xh = jnp.zeros((2, XW), f32)
    xh = xh.at[0, 0:E].set(emb).at[0, E:EL].set(nlg).at[1, 0:H].set(h0)

    enc = jnp.asarray(encoder_outputs, f32)       # (S, 2H)

    args = (xh, enc, packed["w_wide"], packed["w_h"], packed["w_out"], packed["bias"])

    out, hnew, attnw = pl.pallas_call(
        _make_kernel(H, E, L, O, S),
        out_shape=(
            jax.ShapeDtypeStruct((1, O), f32),    # log-softmax output
            jax.ShapeDtypeStruct((1, H), f32),    # new hidden
            jax.ShapeDtypeStruct((1, S), f32),    # attention weights (lane-dense row)
        ),
        in_specs=[pl.BlockSpec(memory_space=pltpu.MemorySpace.VMEM) for _ in args],
        out_specs=(
            pl.BlockSpec(memory_space=pltpu.MemorySpace.VMEM),
            pl.BlockSpec(memory_space=pltpu.MemorySpace.VMEM),
            pl.BlockSpec(memory_space=pltpu.MemorySpace.VMEM),
        ),
    )(*args)

    return out, hnew.reshape(1, 1, H), attnw.reshape(1, 1, S)


def init_params(key, vocab, emb_dim, hidden_size, label_size, output_size):
    H = hidden_size
    keys = jax.random.split(key, 15)

    def w(k, shape, scale=0.1):
        return (scale * jax.random.normal(k, shape)).astype(jnp.float32)

    return dict(
        hidden_size=H,
        embedding=w(keys[0], (vocab, emb_dim), 1.0),                       # word_vectors
        attn_W=w(keys[1], (H, 2 * H)), attn_b=w(keys[2], (H,)),            # GenAttn.attn
        comb_W=w(keys[3], (H, emb_dim + 2 * H + label_size)), comb_b=w(keys[4], (H,)),
        fc1_W=w(keys[5], (H, H)), fc1_b=w(keys[6], (H,)),
        fc2_W=w(keys[7], (H, H)), fc2_b=w(keys[8], (H,)),
        gru_W_ih=w(keys[9], (3 * H, H)), gru_b_ih=w(keys[10], (3 * H,)),
        gru_W_hh=w(keys[11], (3 * H, H)), gru_b_hh=w(keys[12], (3 * H,)),
        out_W=w(keys[13], (output_size, H + label_size + emb_dim)),
        out_b=w(keys[14], (output_size,)),
    )


def reference_forward(input_idx, hidden, encoder_outputs, nlg_class, p):
    """Pure-JAX replica of the PyTorch forward (inference mode) for validation."""
    H = p["hidden_size"]
    emb = p["embedding"][input_idx].reshape(-1).astype(jnp.float32)
    h = hidden.reshape(-1).astype(jnp.float32)
    proj = encoder_outputs @ p["attn_W"].T + p["attn_b"]
    w = jax.nn.softmax(proj @ h)
    ctx = w @ encoder_outputs
    cat = jnp.concatenate([emb, ctx, nlg_class.astype(jnp.float32)])
    x = jnp.maximum(cat @ p["comb_W"].T + p["comb_b"], 0)
    x = jnp.maximum(x @ p["fc1_W"].T + p["fc1_b"], 0)
    x = jnp.maximum(x @ p["fc2_W"].T + p["fc2_b"], 0)
    gi = p["gru_W_ih"] @ x + p["gru_b_ih"]
    gh = p["gru_W_hh"] @ h + p["gru_b_hh"]
    r = jax.nn.sigmoid(gi[:H] + gh[:H])
    z = jax.nn.sigmoid(gi[H:2 * H] + gh[H:2 * H])
    n = jnp.tanh(gi[2 * H:] + r * gh[2 * H:])
    hnew = (1 - z) * n + z * h
    cat2 = jnp.concatenate([hnew, nlg_class.astype(jnp.float32), emb])
    out = jax.nn.log_softmax(cat2 @ p["out_W"].T + p["out_b"])
    return out.reshape(1, -1), hnew.reshape(1, 1, H), w.reshape(1, 1, -1)


if __name__ == "__main__":
    VOCAB, EMB, HIDDEN, LABEL, OUT, SEQ = 50, 16, 32, 8, 16, 8

    key = jax.random.PRNGKey(0)
    pkey, k1, k2, k3 = jax.random.split(key, 4)
    params = init_params(pkey, VOCAB, EMB, HIDDEN, LABEL, OUT)
    packed = pack_params(params)                                       # one-time repack

    input_idx = 7                                                      # decoder input token id
    hidden = 0.1 * jax.random.normal(k1, (1, 1, HIDDEN), jnp.float32)  # GRU hidden state
    encoder_outputs = jax.random.normal(k2, (SEQ, 2 * HIDDEN), jnp.float32)
    nlg_class = jax.random.normal(k3, (LABEL,), jnp.float32)

    out, hnew, attnw = attn_decoder_forward(input_idx, hidden, encoder_outputs, nlg_class, packed)
    jax.block_until_ready((out, hnew, attnw))

    r_out, r_h, r_w = reference_forward(input_idx, hidden, encoder_outputs, nlg_class, params)
    assert out.shape == (1, OUT) and hnew.shape == (1, 1, HIDDEN) and attnw.shape == (1, 1, SEQ)
    assert np.allclose(np.asarray(out), np.asarray(r_out), rtol=1e-4, atol=1e-4)
    assert np.allclose(np.asarray(hnew), np.asarray(r_h), rtol=1e-4, atol=1e-4)
    assert np.allclose(np.asarray(attnw), np.asarray(r_w), rtol=1e-4, atol=1e-4)

    print("KERNEL_OK")
</pallas_src>

<mosaic_0001>
module attributes {stable_mosaic.version = 11 : i64} {
  func.func @kernel(%arg0: memref<2x32xf32, #tpu.memory_space<vmem>>, %arg1: memref<8x64xf32, #tpu.memory_space<vmem>>, %arg2: memref<96x96xf32, #tpu.memory_space<vmem>>, %arg3: memref<152x32xf32, #tpu.memory_space<vmem>>, %arg4: memref<56x16xf32, #tpu.memory_space<vmem>>, %arg5: memref<8x96xf32, #tpu.memory_space<vmem>>, %arg6: memref<1x16xf32, #tpu.memory_space<vmem>>, %arg7: memref<1x32xf32, #tpu.memory_space<vmem>>, %arg8: memref<1x8xf32, #tpu.memory_space<vmem>>) attributes {dimension_semantics = [], scalar_prefetch = 0 : i64, scratch_operands = 0 : i64, tpu.core_type = #tpu.core_type<tc>} {
    %c0 = arith.constant 0 : index
    %c0_0 = arith.constant 0 : index
    %0 = vector.load %arg0[%c0, %c0_0] : memref<2x32xf32, #tpu.memory_space<vmem>>, vector<1x24xf32>
    %c1 = arith.constant 1 : index
    %c0_1 = arith.constant 0 : index
    %1 = vector.load %arg0[%c1, %c0_1] : memref<2x32xf32, #tpu.memory_space<vmem>>, vector<1x32xf32>
    %c0_2 = arith.constant 0 : index
    %c0_3 = arith.constant 0 : index
    %2 = vector.load %arg1[%c0_2, %c0_3] : memref<8x64xf32, #tpu.memory_space<vmem>>, vector<8x64xf32>
    %c0_4 = arith.constant 0 : index
    %c0_5 = arith.constant 0 : index
    %3 = vector.load %arg2[%c0_4, %c0_5] : memref<96x96xf32, #tpu.memory_space<vmem>>, vector<32x64xf32>
    %cst = arith.constant dense<0.000000e+00> : vector<1x64xf32>
    %4 = tpu.matmul %1, %3, %cst {dimension_numbers = #tpu.dot_dimension_numbers<[1], [0], [0], [1], [0, 0, 1, 1], [], []>} : vector<1x32xf32>, vector<32x64xf32>, vector<1x64xf32> -> vector<1x64xf32>
    %c0_6 = arith.constant 0 : index
    %c0_7 = arith.constant 0 : index
    %5 = vector.load %arg5[%c0_6, %c0_7] : memref<8x96xf32, #tpu.memory_space<vmem>>, vector<1x32xf32>
    %6 = arith.mulf %1, %5 : vector<1x32xf32>
    %cst_8 = arith.constant dense<0.000000e+00> : vector<1xf32>
    %7 = vector.multi_reduction <add>, %6, %cst_8 [1] : vector<1x32xf32> to vector<1xf32>
    %8 = vector.shape_cast %7 : vector<1xf32> to vector<1x1xf32>
    %cst_9 = arith.constant dense<0.000000e+00> : vector<1x8xf32>
    %9 = tpu.matmul %4, %2, %cst_9 {dimension_numbers = #tpu.dot_dimension_numbers<[1], [1], [0], [0], [0, 0, 1, 0], [], []>} : vector<1x64xf32>, vector<8x64xf32>, vector<1x8xf32> -> vector<1x8xf32>
    %10 = vector.broadcast %8 : vector<1x1xf32> to vector<1x8xf32>
    %11 = arith.addf %9, %10 : vector<1x8xf32>
    %cst_10 = arith.constant dense<0xFF800000> : vector<1xf32>
    %12 = vector.multi_reduction <maximumf>, %11, %cst_10 [1] : vector<1x8xf32> to vector<1xf32>
    %13 = vector.shape_cast %12 : vector<1xf32> to vector<1x1xf32>
    %14 = vector.broadcast %13 : vector<1x1xf32> to vector<1x8xf32>
    %15 = arith.subf %11, %14 : vector<1x8xf32>
    %16 = math.exp %15 : vector<1x8xf32>
    %cst_11 = arith.constant dense<0.000000e+00> : vector<1xf32>
    %17 = vector.multi_reduction <add>, %16, %cst_11 [1] : vector<1x8xf32> to vector<1xf32>
    %18 = vector.shape_cast %17 : vector<1xf32> to vector<1x1xf32>
    %19 = tpu.reciprocal %18 {approx = true} : vector<1x1xf32> -> vector<1x1xf32>
    %20 = arith.mulf %18, %19 : vector<1x1xf32>
    %cst_12 = arith.constant 2.000000e+00 : f32
    %21 = vector.broadcast %cst_12 : f32 to vector<1x1xf32>
    %22 = arith.subf %21, %20 : vector<1x1xf32>
    %23 = arith.mulf %19, %22 : vector<1x1xf32>
    %24 = vector.broadcast %23 : vector<1x1xf32> to vector<1x8xf32>
    %25 = arith.mulf %16, %24 : vector<1x8xf32>
    %c0_13 = arith.constant 0 : index
    %c0_14 = arith.constant 0 : index
    %26 = vector.load %arg8[%c0_13, %c0_14] : memref<1x8xf32, #tpu.memory_space<vmem>>, vector<1x8xf32>
    tpu.vector_store %arg8[%c0_13, %c0_14], %25 {strides = array<i32>} : memref<1x8xf32, #tpu.memory_space<vmem>>, vector<1x8xf32>,
    %cst_15 = arith.constant dense<0.000000e+00> : vector<1x64xf32>
    %27 = tpu.matmul %25, %2, %cst_15 {dimension_numbers = #tpu.dot_dimension_numbers<[1], [0], [0], [1], [0, 0, 1, 1], [], []>} : vector<1x8xf32>, vector<8x64xf32>, vector<1x64xf32> -> vector<1x64xf32>
    %c0_16 = arith.constant 0 : index
    %c0_17 = arith.constant 0 : index
    %28 = vector.load %arg3[%c0_16, %c0_17] : memref<152x32xf32, #tpu.memory_space<vmem>>, vector<64x32xf32>
    %cst_18 = arith.constant dense<0.000000e+00> : vector<1x32xf32>
    %29 = tpu.matmul %27, %28, %cst_18 {dimension_numbers = #tpu.dot_dimension_numbers<[1], [0], [0], [1], [0, 0, 1, 1], [], []>} : vector<1x64xf32>, vector<64x32xf32>, vector<1x32xf32> -> vector<1x32xf32>
    %c64 = arith.constant 64 : index
    %c0_19 = arith.constant 0 : index
    %30 = vector.load %arg3[%c64, %c0_19] : memref<152x32xf32, #tpu.memory_space<vmem>>, vector<24x32xf32>
    %cst_20 = arith.constant dense<0.000000e+00> : vector<1x32xf32>
    %31 = tpu.matmul %0, %30, %cst_20 {dimension_numbers = #tpu.dot_dimension_numbers<[1], [0], [0], [1], [0, 0, 1, 1], [], []>} : vector<1x24xf32>, vector<24x32xf32>, vector<1x32xf32> -> vector<1x32xf32>
    %32 = arith.addf %29, %31 : vector<1x32xf32>
    %c1_21 = arith.constant 1 : index
    %c0_22 = arith.constant 0 : index
    %33 = vector.load %arg5[%c1_21, %c0_22] : memref<8x96xf32, #tpu.memory_space<vmem>>, vector<1x32xf32>
    %34 = arith.addf %32, %33 : vector<1x32xf32>
    %cst_23 = arith.constant 0.000000e+00 : f32
    %35 = vector.broadcast %cst_23 : f32 to vector<1x32xf32>
    %36 = arith.maximumf %34, %35 : vector<1x32xf32>
    %c88 = arith.constant 88 : index
    %c0_24 = arith.constant 0 : index
    %37 = vector.load %arg3[%c88, %c0_24] : memref<152x32xf32, #tpu.memory_space<vmem>>, vector<32x32xf32>
    %cst_25 = arith.constant dense<0.000000e+00> : vector<1x32xf32>
    %38 = tpu.matmul %36, %37, %cst_25 {dimension_numbers = #tpu.dot_dimension_numbers<[1], [0], [0], [1], [0, 0, 1, 1], [], []>} : vector<1x32xf32>, vector<32x32xf32>, vector<1x32xf32> -> vector<1x32xf32>
    %c2 = arith.constant 2 : index
    %c0_26 = arith.constant 0 : index
    %39 = vector.load %arg5[%c2, %c0_26] : memref<8x96xf32, #tpu.memory_space<vmem>>, vector<1x32xf32>
    %40 = arith.addf %38, %39 : vector<1x32xf32>
    %cst_27 = arith.constant 0.000000e+00 : f32
    %41 = vector.broadcast %cst_27 : f32 to vector<1x32xf32>
    %42 = arith.maximumf %40, %41 : vector<1x32xf32>
    %c120 = arith.constant 120 : index
    %c0_28 = arith.constant 0 : index
    %43 = vector.load %arg3[%c120, %c0_28] : memref<152x32xf32, #tpu.memory_space<vmem>>, vector<32x32xf32>
    %cst_29 = arith.constant dense<0.000000e+00> : vector<1x32xf32>
    %44 = tpu.matmul %42, %43, %cst_29 {dimension_numbers = #tpu.dot_dimension_numbers<[1], [0], [0], [1], [0, 0, 1, 1], [], []>} : vector<1x32xf32>, vector<32x32xf32>, vector<1x32xf32> -> vector<1x32xf32>
    %c3 = arith.constant 3 : index
    %c0_30 = arith.constant 0 : index
    %45 = vector.load %arg5[%c3, %c0_30] : memref<8x96xf32, #tpu.memory_space<vmem>>, vector<1x32xf32>
    %46 = arith.addf %44, %45 : vector<1x32xf32>
    %cst_31 = arith.constant 0.000000e+00 : f32
    %47 = vector.broadcast %cst_31 : f32 to vector<1x32xf32>
    %48 = arith.maximumf %46, %47 : vector<1x32xf32>
    %c32 = arith.constant 32 : index
    %c0_32 = arith.constant 0 : index
    %49 = vector.load %arg2[%c32, %c0_32] : memref<96x96xf32, #tpu.memory_space<vmem>>, vector<32x96xf32>
    %cst_33 = arith.constant dense<0.000000e+00> : vector<1x96xf32>
    %50 = tpu.matmul %48, %49, %cst_33 {dimension_numbers = #tpu.dot_dimension_numbers<[1], [0], [0], [1], [0, 0, 1, 1], [], []>} : vector<1x32xf32>, vector<32x96xf32>, vector<1x96xf32> -> vector<1x96xf32>
    %c4 = arith.constant 4 : index
    %c0_34 = arith.constant 0 : index
    %51 = vector.load %arg5[%c4, %c0_34] : memref<8x96xf32, #tpu.memory_space<vmem>>, vector<1x96xf32>
    %52 = arith.addf %50, %51 : vector<1x96xf32>
    %c64_35 = arith.constant 64 : index
    %c0_36 = arith.constant 0 : index
    %53 = vector.load %arg2[%c64_35, %c0_36] : memref<96x96xf32, #tpu.memory_space<vmem>>, vector<32x96xf32>
    %cst_37 = arith.constant dense<0.000000e+00> : vector<1x96xf32>
    %54 = tpu.matmul %1, %53, %cst_37 {dimension_numbers = #tpu.dot_dimension_numbers<[1], [0], [0], [1], [0, 0, 1, 1], [], []>} : vector<1x32xf32>, vector<32x96xf32>, vector<1x96xf32> -> vector<1x96xf32>
    %c5 = arith.constant 5 : index
    %c0_38 = arith.constant 0 : index
    %55 = vector.load %arg5[%c5, %c0_38] : memref<8x96xf32, #tpu.memory_space<vmem>>, vector<1x96xf32>
    %56 = arith.addf %54, %55 : vector<1x96xf32>
    %57 = vector.extract_strided_slice %52 {offsets = [0, 0], sizes = [1, 32], strides = [1, 1]} : vector<1x96xf32> to vector<1x32xf32>
    %58 = vector.extract_strided_slice %56 {offsets = [0, 0], sizes = [1, 32], strides = [1, 1]} : vector<1x96xf32> to vector<1x32xf32>
    %59 = arith.addf %57, %58 : vector<1x32xf32>
    %60 = arith.negf %59 : vector<1x32xf32>
    %61 = math.exp %60 : vector<1x32xf32>
    %cst_39 = arith.constant 1.000000e+00 : f32
    %62 = vector.broadcast %cst_39 : f32 to vector<1x32xf32>
    %63 = arith.addf %62, %61 : vector<1x32xf32>
    %64 = arith.divf %62, %63 : vector<1x32xf32>
    %65 = vector.extract_strided_slice %52 {offsets = [0, 32], sizes = [1, 32], strides = [1, 1]} : vector<1x96xf32> to vector<1x32xf32>
    %66 = vector.extract_strided_slice %56 {offsets = [0, 32], sizes = [1, 32], strides = [1, 1]} : vector<1x96xf32> to vector<1x32xf32>
    %67 = arith.addf %65, %66 : vector<1x32xf32>
    %68 = arith.negf %67 : vector<1x32xf32>
    %69 = math.exp %68 : vector<1x32xf32>
    %cst_40 = arith.constant 1.000000e+00 : f32
    %70 = vector.broadcast %cst_40 : f32 to vector<1x32xf32>
    %71 = arith.addf %70, %69 : vector<1x32xf32>
    %72 = arith.divf %70, %71 : vector<1x32xf32>
    %73 = vector.extract_strided_slice %52 {offsets = [0, 64], sizes = [1, 32], strides = [1, 1]} : vector<1x96xf32> to vector<1x32xf32>
    %74 = vector.extract_strided_slice %56 {offsets = [0, 64], sizes = [1, 32], strides = [1, 1]} : vector<1x96xf32> to vector<1x32xf32>
    %75 = arith.mulf %64, %74 : vector<1x32xf32>
    %76 = arith.addf %73, %75 : vector<1x32xf32>
    %77 = math.tanh %76 : vector<1x32xf32>
    %cst_41 = arith.constant 1.000000e+00 : f32
    %78 = vector.broadcast %cst_41 : f32 to vector<1x32xf32>
    %79 = arith.subf %78, %72 : vector<1x32xf32>
    %80 = arith.mulf %79, %77 : vector<1x32xf32>
    %81 = arith.mulf %72, %1 : vector<1x32xf32>
    %82 = arith.addf %80, %81 : vector<1x32xf32>
    %c0_42 = arith.constant 0 : index
    %c0_43 = arith.constant 0 : index
    %83 = vector.load %arg7[%c0_42, %c0_43] : memref<1x32xf32, #tpu.memory_space<vmem>>, vector<1x32xf32>
    tpu.vector_store %arg7[%c0_42, %c0_43], %82 {strides = array<i32>} : memref<1x32xf32, #tpu.memory_space<vmem>>, vector<1x32xf32>,
    %c0_44 = arith.constant 0 : index
    %c0_45 = arith.constant 0 : index
    %84 = vector.load %arg4[%c0_44, %c0_45] : memref<56x16xf32, #tpu.memory_space<vmem>>, vector<32x16xf32>
    %cst_46 = arith.constant dense<0.000000e+00> : vector<1x16xf32>
    %85 = tpu.matmul %82, %84, %cst_46 {dimension_numbers = #tpu.dot_dimension_numbers<[1], [0], [0], [1], [0, 0, 1, 1], [], []>} : vector<1x32xf32>, vector<32x16xf32>, vector<1x16xf32> -> vector<1x16xf32>
    %c32_47 = arith.constant 32 : index
    %c0_48 = arith.constant 0 : index
    %86 = vector.load %arg4[%c32_47, %c0_48] : memref<56x16xf32, #tpu.memory_space<vmem>>, vector<24x16xf32>
    %cst_49 = arith.constant dense<0.000000e+00> : vector<1x16xf32>
    %87 = tpu.matmul %0, %86, %cst_49 {dimension_numbers = #tpu.dot_dimension_numbers<[1], [0], [0], [1], [0, 0, 1, 1], [], []>} : vector<1x24xf32>, vector<24x16xf32>, vector<1x16xf32> -> vector<1x16xf32>
    %88 = arith.addf %85, %87 : vector<1x16xf32>
    %c6 = arith.constant 6 : index
    %c0_50 = arith.constant 0 : index
    %89 = vector.load %arg5[%c6, %c0_50] : memref<8x96xf32, #tpu.memory_space<vmem>>, vector<1x16xf32>
    %90 = arith.addf %88, %89 : vector<1x16xf32>
    %cst_51 = arith.constant dense<0xFF800000> : vector<1xf32>
    %91 = vector.multi_reduction <maximumf>, %90, %cst_51 [1] : vector<1x16xf32> to vector<1xf32>
    %92 = vector.shape_cast %91 : vector<1xf32> to vector<1x1xf32>
    %93 = vector.broadcast %92 : vector<1x1xf32> to vector<1x16xf32>
    %94 = arith.subf %90, %93 : vector<1x16xf32>
    %95 = math.exp %94 : vector<1x16xf32>
    %cst_52 = arith.constant dense<0.000000e+00> : vector<1xf32>
    %96 = vector.multi_reduction <add>, %95, %cst_52 [1] : vector<1x16xf32> to vector<1xf32>
    %97 = vector.shape_cast %96 : vector<1xf32> to vector<1x1xf32>
    %98 = math.log %97 : vector<1x1xf32>
    %99 = arith.addf %98, %92 : vector<1x1xf32>
    %100 = vector.broadcast %99 : vector<1x1xf32> to vector<1x16xf32>
    %101 = arith.subf %90, %100 : vector<1x16xf32>
    %c0_53 = arith.constant 0 : index
    %c0_54 = arith.constant 0 : index
    %102 = vector.load %arg6[%c0_53, %c0_54] : memref<1x16xf32, #tpu.memory_space<vmem>>, vector<1x16xf32>
    tpu.vector_store %arg6[%c0_53, %c0_54], %101 {strides = array<i32>} : memref<1x16xf32, #tpu.memory_space<vmem>>, vector<1x16xf32>,
    return
  }
}

</mosaic_0001>

<llo_original>
// kernel: tpu_custom_call.1
$region0: #{tpu_custom_call.1}
  #allocation0 [shape = 'u32[]', space=smem, size = 0x4, offset = 0x4, fixed_abs, tag = 'smem constant byte address 0x4 - core index']
  #allocation1 [shape = 'u32[144,128]{1,0:T(1,128)}', space=vmem, size = 0x12000, scoped, tag = 'internal scratch']
  %s0 = inlined_call_operand.vmem [shape: f32[2,32], index: 0, kind: input, shape index: {}]
  %s1 = inlined_call_operand.vmem [shape: f32[8,64], index: 1, kind: input, shape index: {}]
  %s2 = inlined_call_operand.vmem [shape: f32[96,96], index: 2, kind: input, shape index: {}]
  %s3 = inlined_call_operand.vmem [shape: f32[152,32], index: 3, kind: input, shape index: {}]
  %s4 = inlined_call_operand.vmem [shape: f32[56,16], index: 4, kind: input, shape index: {}]
  %s5 = inlined_call_operand.vmem [shape: f32[8,96], index: 5, kind: input, shape index: {}]
  %s6 = inlined_call_operand.hbm [shape: f32[1,16], index: 6, kind: output, shape index: {0}]
  %s7 = inlined_call_operand.hbm [shape: f32[1,32], index: 7, kind: output, shape index: {1}]
  %s8 = inlined_call_operand.hbm [shape: f32[1,8], index: 8, kind: output, shape index: {2}]
  %9 = xla_tuple %s6, %s7, %s8
  %s10 = sld [smem:[#allocation0]]
  $region50: #{tpu_custom_call.1} parent=0
    _
  %s12 = ssub.s32 1, %s10
  %s13 = scalar_select 0, %s12, %s10
  $region1: #{tpu_custom_call.1} parent=0
    #allocation2 [shape = 'u8[512]{0}', space=vmem, size = 0x400, scoped, tag = 'output window, operand 0, single buffered']
    #allocation3 [shape = 's32[1]{0}', space=sflag, size = 0x4, scoped, tag = 'scoped memory for tpu_custom_call.1']
    #allocation4 [shape = 'u8[512]{0}', space=vmem, size = 0x400, scoped, tag = 'output window, operand 1, single buffered']
    #allocation5 [shape = 's32[1]{0}', space=sflag, size = 0x4, scoped, tag = 'scoped memory for tpu_custom_call.1']
    #allocation6 [shape = 'u8[512]{0}', space=vmem, size = 0x400, scoped, tag = 'output window, operand 2, single buffered']
    %14 = vsyncpa [#allocation3], 0
    %15 = vsyncpa [#allocation5], 0
    // Predicated region
    $region2: #{tpu_custom_call.1} parent=1 // pred_check
      _
    $region3: #{tpu_custom_call.1} parent=1 // pred_check_branch
      %17 = sbr.rel (0) target = $region5
    $region4: #{tpu_custom_call.1} parent=1 // pred_region
      _
    $region5: #{tpu_custom_call.1} parent=1 // pred_fallthru
      _
    // Predicated region
    $region6: #{tpu_custom_call.1} parent=1 // pred_check
      _
    $region7: #{tpu_custom_call.1} parent=1 // pred_check_branch
      %19 = sbr.rel (0) target = $region9
    $region8: #{tpu_custom_call.1} parent=1 // pred_region
      _
    $region9: #{tpu_custom_call.1} parent=1 // pred_fallthru
      _
    // Predicated region
    $region10: #{tpu_custom_call.1} parent=1 // pred_check
      _
    $region11: #{tpu_custom_call.1} parent=1 // pred_check_branch
      %21 = sbr.rel (0) target = $region13
    $region12: #{tpu_custom_call.1} parent=1 // pred_region
      _
    $region13: #{tpu_custom_call.1} parent=1 // pred_fallthru
      _
    // Predicated region
    $region14: #{tpu_custom_call.1} parent=1 // pred_check
      _
    $region15: #{tpu_custom_call.1} parent=1 // pred_check_branch
      %23 = sbr.rel (0) target = $region17
    $region16: #{tpu_custom_call.1} parent=1 // pred_region
      _
    $region17: #{tpu_custom_call.1} parent=1 // pred_fallthru
      _
    // Predicated region
    $region18: #{tpu_custom_call.1} parent=1 // pred_check
      _
    $region19: #{tpu_custom_call.1} parent=1 // pred_check_branch
      %25 = sbr.rel (0) target = $region21
    $region20: #{tpu_custom_call.1} parent=1 // pred_region
      _
    $region21: #{tpu_custom_call.1} parent=1 // pred_fallthru
      _
    // Predicated region
    $region22: #{tpu_custom_call.1} parent=1 // pred_check
      _
    $region23: #{tpu_custom_call.1} parent=1 // pred_check_branch
      %27 = sbr.rel (0) target = $region25
    $region24: #{tpu_custom_call.1} parent=1 // pred_region
      _
    $region25: #{tpu_custom_call.1} parent=1 // pred_fallthru
      _
    %v28 = vld [vmem:[%s0] sm:$0x1]
    %v29 = vld [vmem:[%s0 + $0x1] sm:$0x1]
    %v30 = vld [vmem:[%s1] sm:$0xff]
    %v31 = vld [vmem:[%s2] sm:$0xff]
    %v32 = vld [vmem:[%s2 + $0x8] sm:$0xff]
    %v33 = vld [vmem:[%s2 + $0x10] sm:$0xff]
    %v34 = vld [vmem:[%s2 + $0x18] sm:$0xff]
    %vm35 = vcmask 261120
    %v37 = vsel %vm35, %v29, 0
    %39 = vmatprep.subr.mxu0 0.0
    %40 = vmatpush1.msra.mxu0 %v31
    %41 = vmatprep.subr.mxu0 0.0
    %42 = vmatpush1.msra.mxu0 %v32
    %43 = vmatprep.subr.mxu0 0.0
    %44 = vmatpush1.msra.mxu0 %v33
    %45 = vmatprep.subr.mxu0 0.0
    %46 = vmatpush1.msra.mxu0 %v34
    %47 = vmatprep.subr.mxu0 0.0
    %48 = vmatpush1.msra.mxu0 0.0
    %49 = vmatprep.subr.mxu0 0.0
    %50 = vmatpush1.msra.mxu0 0.0
    %51 = vmatprep.subr.mxu0 0.0
    %52 = vmatpush1.msra.mxu0 0.0
    %53 = vmatprep.subr.mxu0 0.0
    %54 = vmatpush1.msra.mxu0 0.0
    %55 = vmatprep.subr.mxu0 0.0
    %56 = vmatpush1.msra.mxu0 0.0
    %57 = vmatprep.subr.mxu0 0.0
    %58 = vmatpush1.msra.mxu0 0.0
    %59 = vmatprep.subr.mxu0 0.0
    %60 = vmatpush1.msra.mxu0 0.0
    %61 = vmatprep.subr.mxu0 0.0
    %62 = vmatpush1.msra.mxu0 0.0
    %63 = vmatprep.subr.mxu0 0.0
    %64 = vmatpush1.msra.mxu0 0.0
    %65 = vmatprep.subr.mxu0 0.0
    %66 = vmatpush1.msra.mxu0 0.0
    %67 = vmatprep.subr.mxu0 0.0
    %68 = vmatpush1.msra.mxu0 0.0
    %69 = vmatprep.subr.mxu0 0.0
    %70 = vmatpush1.msra.mxu0 0.0
    %71 = vmatprep.subr.mxu0 0.0
    %72 = vmatpush1.msra.mxu0 0.0
    %73 = vmatprep.subr.mxu0 0.0
    %74 = vmatpush1.msra.mxu0 0.0
    %75 = vmatprep.subr.mxu0 0.0
    %76 = vmatpush1.msra.mxu0 0.0
    %77 = vmatprep.subr.mxu0 0.0
    %78 = vmatpush1.msra.mxu0 0.0
    %79 = vmatprep.subr.mxu0 0.0
    %80 = vmatpush1.msra.mxu0 0.0
    %81 = vmatprep.subr.mxu0 0.0
    %82 = vmatpush1.msra.mxu0 0.0
    %83 = vmatprep.subr.mxu0 0.0
    %84 = vmatpush1.msra.mxu0 0.0
    %85 = vmatprep.subr.mxu0 0.0
    %86 = vmatpush1.msra.mxu0 0.0
    %87 = vmatprep.subr.mxu0 0.0
    %88 = vmatpush1.msra.mxu0 0.0
    %89 = vmatprep.subr.mxu0 0.0
    %90 = vmatpush1.msra.mxu0 0.0
    %91 = vmatprep.subr.mxu0 0.0
    %92 = vmatpush1.msra.mxu0 0.0
    %93 = vmatprep.subr.mxu0 0.0
    %94 = vmatpush1.msra.mxu0 0.0
    %95 = vmatprep.subr.mxu0 0.0
    %96 = vmatpush1.msra.mxu0 0.0
    %97 = vmatprep.subr.mxu0 0.0
    %98 = vmatpush1.msra.mxu0 0.0
    %99 = vmatprep.subr.mxu0 0.0
    %100 = vmatpush1.msra.mxu0 0.0
    %101 = vmatprep.subr.mxu0 0.0
    %102 = vmatpush1.msra.mxu0 0.0
    %103 = vmatprep.mubr.f32.mxu0 0.0
    %104 = vmatmul.mubr.f32.gmra.mrb[0].mxu0 %v37
    %v105 = vpop.f32.mrb[0].mxu0
    %v106 = vadd.f32 0.0, %v105
    %v107 = vpop.f32.mrb[0].mxu0
    %108 = vdwg.mxu0
    %v109 = vld [vmem:[%s5] sm:$0x1]
    %v110 = vmul.f32 %v29, %v109
    %vm111 = vcmask 253952
    %v112 = vsel %vm111, %v110, 0.0
    %113 = vadd.xlane.f32.xlu0 %v112
    %v114 = vpop.xlane.xlu0 %113
    %vm115 = vcmask 523264
    %v117 = vsel %vm115, %v106, 0
    %v120 = vsel %vm115, %v30, 0
    %122 = vmatprep.subr.mxu0 0.0
    %123 = vmatpush1.xpose.msra.mxu0 %v120
    %124 = vmatprep.subr.mxu0 0.0
    %125 = vmatpush1.xpose.msra.mxu0 0.0
    %126 = vmatprep.subr.mxu0 0.0
    %127 = vmatpush1.xpose.msra.mxu0 0.0
    %128 = vmatprep.subr.mxu0 0.0
    %129 = vmatpush1.xpose.msra.mxu0 0.0
    %130 = vmatprep.subr.mxu0 0.0
    %131 = vmatpush1.xpose.msra.mxu0 0.0
    %132 = vmatprep.subr.mxu0 0.0
    %133 = vmatpush1.xpose.msra.mxu0 0.0
    %134 = vmatprep.subr.mxu0 0.0
    %135 = vmatpush1.xpose.msra.mxu0 0.0
    %136 = vmatprep.subr.mxu0 0.0
    %137 = vmatpush1.xpose.msra.mxu0 0.0
    %138 = vmatprep.subr.mxu0 0.0
    %139 = vmatpush1.xpose.msra.mxu0 0.0
    %140 = vmatprep.subr.mxu0 0.0
    %141 = vmatpush1.xpose.msra.mxu0 0.0
    %142 = vmatprep.subr.mxu0 0.0
    %143 = vmatpush1.xpose.msra.mxu0 0.0
    %144 = vmatprep.subr.mxu0 0.0
    %145 = vmatpush1.xpose.msra.mxu0 0.0
    %146 = vmatprep.subr.mxu0 0.0
    %147 = vmatpush1.xpose.msra.mxu0 0.0
    %148 = vmatprep.subr.mxu0 0.0
    %149 = vmatpush1.xpose.msra.mxu0 0.0
    %150 = vmatprep.subr.mxu0 0.0
    %151 = vmatpush1.xpose.msra.mxu0 0.0
    %152 = vmatprep.subr.mxu0 0.0
    %153 = vmatpush1.xpose.msra.mxu0 0.0
    %154 = vmatprep.subr.mxu0 0.0
    %155 = vmatpush1.xpose.msra.mxu0 0.0
    %156 = vmatprep.subr.mxu0 0.0
    %157 = vmatpush1.xpose.msra.mxu0 0.0
    %158 = vmatprep.subr.mxu0 0.0
    %159 = vmatpush1.xpose.msra.mxu0 0.0
    %160 = vmatprep.subr.mxu0 0.0
    %161 = vmatpush1.xpose.msra.mxu0 0.0
    %162 = vmatprep.subr.mxu0 0.0
    %163 = vmatpush1.xpose.msra.mxu0 0.0
    %164 = vmatprep.subr.mxu0 0.0
    %165 = vmatpush1.xpose.msra.mxu0 0.0
    %166 = vmatprep.subr.mxu0 0.0
    %167 = vmatpush1.xpose.msra.mxu0 0.0
    %168 = vmatprep.subr.mxu0 0.0
    %169 = vmatpush1.xpose.msra.mxu0 0.0
    %170 = vmatprep.subr.mxu0 0.0
    %171 = vmatpush1.xpose.msra.mxu0 0.0
    %172 = vmatprep.subr.mxu0 0.0
    %173 = vmatpush1.xpose.msra.mxu0 0.0
    %174 = vmatprep.subr.mxu0 0.0
    %175 = vmatpush1.xpose.msra.mxu0 0.0
    %176 = vmatprep.subr.mxu0 0.0
    %177 = vmatpush1.xpose.msra.mxu0 0.0
    %178 = vmatprep.subr.mxu0 0.0
    %179 = vmatpush1.xpose.msra.mxu0 0.0
    %180 = vmatprep.subr.mxu0 0.0
    %181 = vmatpush1.xpose.msra.mxu0 0.0
    %182 = vmatprep.subr.mxu0 0.0
    %183 = vmatpush1.xpose.msra.mxu0 0.0
    %184 = vmatprep.subr.mxu0 0.0
    %185 = vmatpush1.xpose.msra.mxu0 0.0
    %186 = vmatprep.mubr.f32.mxu0 0.0
    %187 = vmatmul.mubr.f32.gmra.mrb[0].mxu0 %v117
    %v188 = vpop.f32.mrb[0].mxu0
    %v189 = vadd.f32 %v114, %v188
    %v190 = vpop.f32.mrb[0].mxu0
    %191 = vdwg.mxu0
    %vm192 = vcmask 57344
    %v193 = vsel %vm192, %v189, -inf
    %194 = vmax.xlane.f32.xlu0 %v193
    %v195 = vpop.xlane.xlu0 %194
    %v196 = vsub.f32 %v189, %v195
    %v197 = vmul.f32 %v196, 1.442695
    %v198 = vpow.pop %v197
    %v199 = vsel %vm192, %v198, 0.0
    %200 = vadd.xlane.f32.xlu0 %v199
    %v201 = vpop.xlane.xlu0 %200
    %v202 = vrcp.pop %v201
    %v203 = vmul.f32 %v201, %v202
    %v204 = vsub.f32 2.0, %v203
    %v205 = vmul.f32 %v202, %v204
    %v206 = vmul.f32 %v198, %v205
    %207 = vst.msk [vmem:[#allocation6] sm:$0x1] %vm192, %v206
    %vm208 = vcmask 64512
    %v210 = vsel %vm208, %v206, 0
    %212 = vmatprep.subr.mxu0 0.0
    %213 = vmatpush1.msra.mxu0 %v30
    %214 = vmatprep.subr.mxu0 0.0
    %215 = vmatpush1.msra.mxu0 0.0
    %216 = vmatprep.subr.mxu0 0.0
    %217 = vmatpush1.msra.mxu0 0.0
    %218 = vmatprep.subr.mxu0 0.0
    %219 = vmatpush1.msra.mxu0 0.0
    %220 = vmatprep.subr.mxu0 0.0
    %221 = vmatpush1.msra.mxu0 0.0
    %222 = vmatprep.subr.mxu0 0.0
    %223 = vmatpush1.msra.mxu0 0.0
    %224 = vmatprep.subr.mxu0 0.0
    %225 = vmatpush1.msra.mxu0 0.0
    %226 = vmatprep.subr.mxu0 0.0
    %227 = vmatpush1.msra.mxu0 0.0
    %228 = vmatprep.subr.mxu0 0.0
    %229 = vmatpush1.msra.mxu0 0.0
    %230 = vmatprep.subr.mxu0 0.0
    %231 = vmatpush1.msra.mxu0 0.0
    %232 = vmatprep.subr.mxu0 0.0
    %233 = vmatpush1.msra.mxu0 0.0
    %234 = vmatprep.subr.mxu0 0.0
    %235 = vmatpush1.msra.mxu0 0.0
    %236 = vmatprep.subr.mxu0 0.0
    %237 = vmatpush1.msra.mxu0 0.0
    %238 = vmatprep.subr.mxu0 0.0
    %239 = vmatpush1.msra.mxu0 0.0
    %240 = vmatprep.subr.mxu0 0.0
    %241 = vmatpush1.msra.mxu0 0.0
    %242 = vmatprep.subr.mxu0 0.0
    %243 = vmatpush1.msra.mxu0 0.0
    %244 = vmatprep.subr.mxu0 0.0
    %245 = vmatpush1.msra.mxu0 0.0
    %246 = vmatprep.subr.mxu0 0.0
    %247 = vmatpush1.msra.mxu0 0.0
    %248 = vmatprep.subr.mxu0 0.0
    %249 = vmatpush1.msra.mxu0 0.0
    %250 = vmatprep.subr.mxu0 0.0
    %251 = vmatpush1.msra.mxu0 0.0
    %252 = vmatprep.subr.mxu0 0.0
    %253 = vmatpush1.msra.mxu0 0.0
    %254 = vmatprep.subr.mxu0 0.0
    %255 = vmatpush1.msra.mxu0 0.0
    %256 = vmatprep.subr.mxu0 0.0
    %257 = vmatpush1.msra.mxu0 0.0
    %258 = vmatprep.subr.mxu0 0.0
    %259 = vmatpush1.msra.mxu0 0.0
    %260 = vmatprep.subr.mxu0 0.0
    %261 = vmatpush1.msra.mxu0 0.0
    %262 = vmatprep.subr.mxu0 0.0
    %263 = vmatpush1.msra.mxu0 0.0
    %264 = vmatprep.subr.mxu0 0.0
    %265 = vmatpush1.msra.mxu0 0.0
    %266 = vmatprep.subr.mxu0 0.0
    %267 = vmatpush1.msra.mxu0 0.0
    %268 = vmatprep.subr.mxu0 0.0
    %269 = vmatpush1.msra.mxu0 0.0
    %270 = vmatprep.subr.mxu0 0.0
    %271 = vmatpush1.msra.mxu0 0.0
    %272 = vmatprep.subr.mxu0 0.0
    %273 = vmatpush1.msra.mxu0 0.0
    %274 = vmatprep.subr.mxu0 0.0
    %275 = vmatpush1.msra.mxu0 0.0
    %276 = vmatprep.mubr.f32.mxu0 0.0
    %277 = vmatmul.mubr.f32.gmra.mrb[0].mxu0 %v210
    %v278 = vpop.f32.mrb[0].mxu0
    %v279 = vadd.f32 0.0, %v278
    %v280 = vpop.f32.mrb[0].mxu0
    %281 = vdwg.mxu0
    %v282 = vld [vmem:[%s3] sm:$0xff]
    %v283 = vld [vmem:[%s3 + $0x8] sm:$0xff]
    %v284 = vld [vmem:[%s3 + $0x10] sm:$0xff]
    %v285 = vld [vmem:[%s3 + $0x18] sm:$0xff]
    %v286 = vld [vmem:[%s3 + $0x20] sm:$0xff]
    %v287 = vld [vmem:[%s3 + $0x28] sm:$0xff]
    %v288 = vld [vmem:[%s3 + $0x30] sm:$0xff]
    %v289 = vld [vmem:[%s3 + $0x38] sm:$0xff]
    %v290 = vld [vmem:[%s3 + $0x40] sm:$0xff]
    %v291 = vld [vmem:[%s3 + $0x48] sm:$0xff]
    %v292 = vld [vmem:[%s3 + $0x50] sm:$0xff]
    %vm293 = vcmask 195584
    %v295 = vsel %vm293, %v28, 0
    %297 = vmatprep.subr.mxu0 0.0
    %298 = vmatpush1.msra.mxu0 %v290
    %299 = vmatprep.subr.mxu0 0.0
    %300 = vmatpush1.msra.mxu0 %v291
    %301 = vmatprep.subr.mxu0 0.0
    %302 = vmatpush1.msra.mxu0 %v292
    %303 = vmatprep.subr.mxu0 0.0
    %304 = vmatpush1.msra.mxu0 0.0
    %305 = vmatprep.subr.mxu0 0.0
    %306 = vmatpush1.msra.mxu0 0.0
    %307 = vmatprep.subr.mxu0 0.0
    %308 = vmatpush1.msra.mxu0 0.0
    %309 = vmatprep.subr.mxu0 0.0
    %310 = vmatpush1.msra.mxu0 0.0
    %311 = vmatprep.subr.mxu0 0.0
    %312 = vmatpush1.msra.mxu0 0.0
    %313 = vmatprep.subr.mxu0 0.0
    %314 = vmatpush1.msra.mxu0 0.0
    %315 = vmatprep.subr.mxu0 0.0
    %316 = vmatpush1.msra.mxu0 0.0
    %317 = vmatprep.subr.mxu0 0.0
    %318 = vmatpush1.msra.mxu0 0.0
    %319 = vmatprep.subr.mxu0 0.0
    %320 = vmatpush1.msra.mxu0 0.0
    %321 = vmatprep.subr.mxu0 0.0
    %322 = vmatpush1.msra.mxu0 0.0
    %323 = vmatprep.subr.mxu0 0.0
    %324 = vmatpush1.msra.mxu0 0.0
    %325 = vmatprep.subr.mxu0 0.0
    %326 = vmatpush1.msra.mxu0 0.0
    %327 = vmatprep.subr.mxu0 0.0
    %328 = vmatpush1.msra.mxu0 0.0
    %329 = vmatprep.subr.mxu0 0.0
    %330 = vmatpush1.msra.mxu0 0.0
    %331 = vmatprep.subr.mxu0 0.0
    %332 = vmatpush1.msra.mxu0 0.0
    %333 = vmatprep.subr.mxu0 0.0
    %334 = vmatpush1.msra.mxu0 0.0
    %335 = vmatprep.subr.mxu0 0.0
    %336 = vmatpush1.msra.mxu0 0.0
    %337 = vmatprep.subr.mxu0 0.0
    %338 = vmatpush1.msra.mxu0 0.0
    %339 = vmatprep.subr.mxu0 0.0
    %340 = vmatpush1.msra.mxu0 0.0
    %341 = vmatprep.subr.mxu0 0.0
    %342 = vmatpush1.msra.mxu0 0.0
    %343 = vmatprep.subr.mxu0 0.0
    %344 = vmatpush1.msra.mxu0 0.0
    %345 = vmatprep.subr.mxu0 0.0
    %346 = vmatpush1.msra.mxu0 0.0
    %347 = vmatprep.subr.mxu0 0.0
    %348 = vmatpush1.msra.mxu0 0.0
    %349 = vmatprep.subr.mxu0 0.0
    %350 = vmatpush1.msra.mxu0 0.0
    %351 = vmatprep.subr.mxu0 0.0
    %352 = vmatpush1.msra.mxu0 0.0
    %353 = vmatprep.subr.mxu0 0.0
    %354 = vmatpush1.msra.mxu0 0.0
    %355 = vmatprep.subr.mxu0 0.0
    %356 = vmatpush1.msra.mxu0 0.0
    %357 = vmatprep.subr.mxu0 0.0
    %358 = vmatpush1.msra.mxu0 0.0
    %359 = vmatprep.subr.mxu0 0.0
    %360 = vmatpush1.msra.mxu0 0.0
    %361 = vmatprep.mubr.f32.mxu0 0.0
    %362 = vmatmul.mubr.f32.gmra.mrb[0].mxu0 %v295
    %v363 = vpop.f32.mrb[0].mxu0
    %v364 = vadd.f32 0.0, %v363
    %v365 = vpop.f32.mrb[0].mxu0
    %366 = vdwg.mxu0
    %v368 = vsel %vm115, %v279, 0
    %370 = vmatprep.subr.mxu0 0.0
    %371 = vmatpush1.msra.mxu0 %v282
    %372 = vmatprep.subr.mxu0 0.0
    %373 = vmatpush1.msra.mxu0 %v283
    %374 = vmatprep.subr.mxu0 0.0
    %375 = vmatpush1.msra.mxu0 %v284
    %376 = vmatprep.subr.mxu0 0.0
    %377 = vmatpush1.msra.mxu0 %v285
    %378 = vmatprep.subr.mxu0 0.0
    %379 = vmatpush1.msra.mxu0 %v286
    %380 = vmatprep.subr.mxu0 0.0
    %381 = vmatpush1.msra.mxu0 %v287
    %382 = vmatprep.subr.mxu0 0.0
    %383 = vmatpush1.msra.mxu0 %v288
    %384 = vmatprep.subr.mxu0 0.0
    %385 = vmatpush1.msra.mxu0 %v289
    %386 = vmatprep.subr.mxu0 0.0
    %387 = vmatpush1.msra.mxu0 0.0
    %388 = vmatprep.subr.mxu0 0.0
    %389 = vmatpush1.msra.mxu0 0.0
    %390 = vmatprep.subr.mxu0 0.0
    %391 = vmatpush1.msra.mxu0 0.0
    %392 = vmatprep.subr.mxu0 0.0
    %393 = vmatpush1.msra.mxu0 0.0
    %394 = vmatprep.subr.mxu0 0.0
    %395 = vmatpush1.msra.mxu0 0.0
    %396 = vmatprep.subr.mxu0 0.0
    %397 = vmatpush1.msra.mxu0 0.0
    %398 = vmatprep.subr.mxu0 0.0
    %399 = vmatpush1.msra.mxu0 0.0
    %400 = vmatprep.subr.mxu0 0.0
    %401 = vmatpush1.msra.mxu0 0.0
    %402 = vmatprep.subr.mxu0 0.0
    %403 = vmatpush1.msra.mxu0 0.0
    %404 = vmatprep.subr.mxu0 0.0
    %405 = vmatpush1.msra.mxu0 0.0
    %406 = vmatprep.subr.mxu0 0.0
    %407 = vmatpush1.msra.mxu0 0.0
    %408 = vmatprep.subr.mxu0 0.0
    %409 = vmatpush1.msra.mxu0 0.0
    %410 = vmatprep.subr.mxu0 0.0
    %411 = vmatpush1.msra.mxu0 0.0
    %412 = vmatprep.subr.mxu0 0.0
    %413 = vmatpush1.msra.mxu0 0.0
    %414 = vmatprep.subr.mxu0 0.0
    %415 = vmatpush1.msra.mxu0 0.0
    %416 = vmatprep.subr.mxu0 0.0
    %417 = vmatpush1.msra.mxu0 0.0
    %418 = vmatprep.subr.mxu0 0.0
    %419 = vmatpush1.msra.mxu0 0.0
    %420 = vmatprep.subr.mxu0 0.0
    %421 = vmatpush1.msra.mxu0 0.0
    %422 = vmatprep.subr.mxu0 0.0
    %423 = vmatpush1.msra.mxu0 0.0
    %424 = vmatprep.subr.mxu0 0.0
    %425 = vmatpush1.msra.mxu0 0.0
    %426 = vmatprep.subr.mxu0 0.0
    %427 = vmatpush1.msra.mxu0 0.0
    %428 = vmatprep.subr.mxu0 0.0
    %429 = vmatpush1.msra.mxu0 0.0
    %430 = vmatprep.subr.mxu0 0.0
    %431 = vmatpush1.msra.mxu0 0.0
    %432 = vmatprep.subr.mxu0 0.0
    %433 = vmatpush1.msra.mxu0 0.0
    %434 = vmatprep.mubr.f32.mxu0 0.0
    %435 = vmatmul.mubr.f32.gmra.mrb[0].mxu0 %v368
    %v436 = vpop.f32.mrb[0].mxu0
    %v437 = vadd.f32 %v364, %v436
    %v438 = vpop.f32.mrb[0].mxu0
    %439 = vdwg.mxu0
    %v440 = vld [vmem:[%s5 + $0x1] sm:$0x1]
    %v441 = vadd.f32 %v437, %v440
    %v442 = vmax.f32 %v441, 0.0
    %v443 = vld [vmem:[%s3 + $0x58] sm:$0xff]
    %v444 = vld [vmem:[%s3 + $0x60] sm:$0xff]
    %v445 = vld [vmem:[%s3 + $0x68] sm:$0xff]
    %v446 = vld [vmem:[%s3 + $0x70] sm:$0xff]
    %v447 = vld [vmem:[%s5 + $0x2] sm:$0x1]
    %v449 = vsel %vm35, %v442, 0
    %451 = vmatprep.subr.mxu0 0.0
    %452 = vmatpush1.msra.mxu0 %v443
    %453 = vmatprep.subr.mxu0 0.0
    %454 = vmatpush1.msra.mxu0 %v444
    %455 = vmatprep.subr.mxu0 0.0
    %456 = vmatpush1.msra.mxu0 %v445
    %457 = vmatprep.subr.mxu0 0.0
    %458 = vmatpush1.msra.mxu0 %v446
    %459 = vmatprep.subr.mxu0 0.0
    %460 = vmatpush1.msra.mxu0 0.0
    %461 = vmatprep.subr.mxu0 0.0
    %462 = vmatpush1.msra.mxu0 0.0
    %463 = vmatprep.subr.mxu0 0.0
    %464 = vmatpush1.msra.mxu0 0.0
    %465 = vmatprep.subr.mxu0 0.0
    %466 = vmatpush1.msra.mxu0 0.0
    %467 = vmatprep.subr.mxu0 0.0
    %468 = vmatpush1.msra.mxu0 0.0
    %469 = vmatprep.subr.mxu0 0.0
    %470 = vmatpush1.msra.mxu0 0.0
    %471 = vmatprep.subr.mxu0 0.0
    %472 = vmatpush1.msra.mxu0 0.0
    %473 = vmatprep.subr.mxu0 0.0
    %474 = vmatpush1.msra.mxu0 0.0
    %475 = vmatprep.subr.mxu0 0.0
    %476 = vmatpush1.msra.mxu0 0.0
    %477 = vmatprep.subr.mxu0 0.0
    %478 = vmatpush1.msra.mxu0 0.0
    %479 = vmatprep.subr.mxu0 0.0
    %480 = vmatpush1.msra.mxu0 0.0
    %481 = vmatprep.subr.mxu0 0.0
    %482 = vmatpush1.msra.mxu0 0.0
    %483 = vmatprep.subr.mxu0 0.0
    %484 = vmatpush1.msra.mxu0 0.0
    %485 = vmatprep.subr.mxu0 0.0
    %486 = vmatpush1.msra.mxu0 0.0
    %487 = vmatprep.subr.mxu0 0.0
    %488 = vmatpush1.msra.mxu0 0.0
    %489 = vmatprep.subr.mxu0 0.0
    %490 = vmatpush1.msra.mxu0 0.0
    %491 = vmatprep.subr.mxu0 0.0
    %492 = vmatpush1.msra.mxu0 0.0
    %493 = vmatprep.subr.mxu0 0.0
    %494 = vmatpush1.msra.mxu0 0.0
    %495 = vmatprep.subr.mxu0 0.0
    %496 = vmatpush1.msra.mxu0 0.0
    %497 = vmatprep.subr.mxu0 0.0
    %498 = vmatpush1.msra.mxu0 0.0
    %499 = vmatprep.subr.mxu0 0.0
    %500 = vmatpush1.msra.mxu0 0.0
    %501 = vmatprep.subr.mxu0 0.0
    %502 = vmatpush1.msra.mxu0 0.0
    %503 = vmatprep.subr.mxu0 0.0
    %504 = vmatpush1.msra.mxu0 0.0
    %505 = vmatprep.subr.mxu0 0.0
    %506 = vmatpush1.msra.mxu0 0.0
    %507 = vmatprep.subr.mxu0 0.0
    %508 = vmatpush1.msra.mxu0 0.0
    %509 = vmatprep.subr.mxu0 0.0
    %510 = vmatpush1.msra.mxu0 0.0
    %511 = vmatprep.subr.mxu0 0.0
    %512 = vmatpush1.msra.mxu0 0.0
    %513 = vmatprep.subr.mxu0 0.0
    %514 = vmatpush1.msra.mxu0 0.0
    %515 = vmatprep.mubr.f32.mxu0 0.0
    %516 = vmatmul.mubr.f32.gmra.mrb[0].mxu0 %v449
    %v517 = vpop.f32.mrb[0].mxu0
    %v518 = vadd.f32 %v447, %v517
    %v519 = vpop.f32.mrb[0].mxu0
    %520 = vdwg.mxu0
    %v521 = vmax.f32 %v518, 0.0
    %v522 = vld [vmem:[%s3 + $0x78] sm:$0xff]
    %v523 = vld [vmem:[%s3 + $0x80] sm:$0xff]
    %v524 = vld [vmem:[%s3 + $0x88] sm:$0xff]
    %v525 = vld [vmem:[%s3 + $0x90] sm:$0xff]
    %v526 = vld [vmem:[%s5 + $0x3] sm:$0x1]
    %v528 = vsel %vm35, %v521, 0
    %530 = vmatprep.subr.mxu0 0.0
    %531 = vmatpush1.msra.mxu0 %v522
    %532 = vmatprep.subr.mxu0 0.0
    %533 = vmatpush1.msra.mxu0 %v523
    %534 = vmatprep.subr.mxu0 0.0
    %535 = vmatpush1.msra.mxu0 %v524
    %536 = vmatprep.subr.mxu0 0.0
    %537 = vmatpush1.msra.mxu0 %v525
    %538 = vmatprep.subr.mxu0 0.0
    %539 = vmatpush1.msra.mxu0 0.0
    %540 = vmatprep.subr.mxu0 0.0
    %541 = vmatpush1.msra.mxu0 0.0
    %542 = vmatprep.subr.mxu0 0.0
    %543 = vmatpush1.msra.mxu0 0.0
    %544 = vmatprep.subr.mxu0 0.0
    %545 = vmatpush1.msra.mxu0 0.0
    %546 = vmatprep.subr.mxu0 0.0
    %547 = vmatpush1.msra.mxu0 0.0
    %548 = vmatprep.subr.mxu0 0.0
    %549 = vmatpush1.msra.mxu0 0.0
    %550 = vmatprep.subr.mxu0 0.0
    %551 = vmatpush1.msra.mxu0 0.0
    %552 = vmatprep.subr.mxu0 0.0
    %553 = vmatpush1.msra.mxu0 0.0
    %554 = vmatprep.subr.mxu0 0.0
    %555 = vmatpush1.msra.mxu0 0.0
    %556 = vmatprep.subr.mxu0 0.0
    %557 = vmatpush1.msra.mxu0 0.0
    %558 = vmatprep.subr.mxu0 0.0
    %559 = vmatpush1.msra.mxu0 0.0
    %560 = vmatprep.subr.mxu0 0.0
    %561 = vmatpush1.msra.mxu0 0.0
    %562 = vmatprep.subr.mxu0 0.0
    %563 = vmatpush1.msra.mxu0 0.0
    %564 = vmatprep.subr.mxu0 0.0
    %565 = vmatpush1.msra.mxu0 0.0
    %566 = vmatprep.subr.mxu0 0.0
    %567 = vmatpush1.msra.mxu0 0.0
    %568 = vmatprep.subr.mxu0 0.0
    %569 = vmatpush1.msra.mxu0 0.0
    %570 = vmatprep.subr.mxu0 0.0
    %571 = vmatpush1.msra.mxu0 0.0
    %572 = vmatprep.subr.mxu0 0.0
    %573 = vmatpush1.msra.mxu0 0.0
    %574 = vmatprep.subr.mxu0 0.0
    %575 = vmatpush1.msra.mxu0 0.0
    %576 = vmatprep.subr.mxu0 0.0
    %577 = vmatpush1.msra.mxu0 0.0
    %578 = vmatprep.subr.mxu0 0.0
    %579 = vmatpush1.msra.mxu0 0.0
    %580 = vmatprep.subr.mxu0 0.0
    %581 = vmatpush1.msra.mxu0 0.0
    %582 = vmatprep.subr.mxu0 0.0
    %583 = vmatpush1.msra.mxu0 0.0
    %584 = vmatprep.subr.mxu0 0.0
    %585 = vmatpush1.msra.mxu0 0.0
    %586 = vmatprep.subr.mxu0 0.0
    %587 = vmatpush1.msra.mxu0 0.0
    %588 = vmatprep.subr.mxu0 0.0
    %589 = vmatpush1.msra.mxu0 0.0
    %590 = vmatprep.subr.mxu0 0.0
    %591 = vmatpush1.msra.mxu0 0.0
    %592 = vmatprep.subr.mxu0 0.0
    %593 = vmatpush1.msra.mxu0 0.0
    %594 = vmatprep.mubr.f32.mxu0 0.0
    %595 = vmatmul.mubr.f32.gmra.mrb[0].mxu0 %v528
    %v596 = vpop.f32.mrb[0].mxu0
    %v597 = vadd.f32 %v526, %v596
    %v598 = vpop.f32.mrb[0].mxu0
    %599 = vdwg.mxu0
    %v600 = vmax.f32 %v597, 0.0
    %v601 = vld [vmem:[%s2 + $0x20] sm:$0xff]
    %v602 = vld [vmem:[%s2 + $0x28] sm:$0xff]
    %v603 = vld [vmem:[%s2 + $0x30] sm:$0xff]
    %v604 = vld [vmem:[%s2 + $0x38] sm:$0xff]
    %v605 = vld [vmem:[%s5 + $0x4] sm:$0x1]
    %v607 = vsel %vm35, %v600, 0
    %609 = vmatprep.subr.mxu0 0.0
    %610 = vmatpush1.msra.mxu0 %v601
    %611 = vmatprep.subr.mxu0 0.0
    %612 = vmatpush1.msra.mxu0 %v602
    %613 = vmatprep.subr.mxu0 0.0
    %614 = vmatpush1.msra.mxu0 %v603
    %615 = vmatprep.subr.mxu0 0.0
    %616 = vmatpush1.msra.mxu0 %v604
    %617 = vmatprep.subr.mxu0 0.0
    %618 = vmatpush1.msra.mxu0 0.0
    %619 = vmatprep.subr.mxu0 0.0
    %620 = vmatpush1.msra.mxu0 0.0
    %621 = vmatprep.subr.mxu0 0.0
    %622 = vmatpush1.msra.mxu0 0.0
    %623 = vmatprep.subr.mxu0 0.0
    %624 = vmatpush1.msra.mxu0 0.0
    %625 = vmatprep.subr.mxu0 0.0
    %626 = vmatpush1.msra.mxu0 0.0
    %627 = vmatprep.subr.mxu0 0.0
    %628 = vmatpush1.msra.mxu0 0.0
    %629 = vmatprep.subr.mxu0 0.0
    %630 = vmatpush1.msra.mxu0 0.0
    %631 = vmatprep.subr.mxu0 0.0
    %632 = vmatpush1.msra.mxu0 0.0
    %633 = vmatprep.subr.mxu0 0.0
    %634 = vmatpush1.msra.mxu0 0.0
    %635 = vmatprep.subr.mxu0 0.0
    %636 = vmatpush1.msra.mxu0 0.0
    %637 = vmatprep.subr.mxu0 0.0
    %638 = vmatpush1.msra.mxu0 0.0
    %639 = vmatprep.subr.mxu0 0.0
    %640 = vmatpush1.msra.mxu0 0.0
    %641 = vmatprep.subr.mxu0 0.0
    %642 = vmatpush1.msra.mxu0 0.0
    %643 = vmatprep.subr.mxu0 0.0
    %644 = vmatpush1.msra.mxu0 0.0
    %645 = vmatprep.subr.mxu0 0.0
    %646 = vmatpush1.msra.mxu0 0.0
    %647 = vmatprep.subr.mxu0 0.0
    %648 = vmatpush1.msra.mxu0 0.0
    %649 = vmatprep.subr.mxu0 0.0
    %650 = vmatpush1.msra.mxu0 0.0
    %651 = vmatprep.subr.mxu0 0.0
    %652 = vmatpush1.msra.mxu0 0.0
    %653 = vmatprep.subr.mxu0 0.0
    %654 = vmatpush1.msra.mxu0 0.0
    %655 = vmatprep.subr.mxu0 0.0
    %656 = vmatpush1.msra.mxu0 0.0
    %657 = vmatprep.subr.mxu0 0.0
    %658 = vmatpush1.msra.mxu0 0.0
    %659 = vmatprep.subr.mxu0 0.0
    %660 = vmatpush1.msra.mxu0 0.0
    %661 = vmatprep.subr.mxu0 0.0
    %662 = vmatpush1.msra.mxu0 0.0
    %663 = vmatprep.subr.mxu0 0.0
    %664 = vmatpush1.msra.mxu0 0.0
    %665 = vmatprep.subr.mxu0 0.0
    %666 = vmatpush1.msra.mxu0 0.0
    %667 = vmatprep.subr.mxu0 0.0
    %668 = vmatpush1.msra.mxu0 0.0
    %669 = vmatprep.subr.mxu0 0.0
    %670 = vmatpush1.msra.mxu0 0.0
    %671 = vmatprep.subr.mxu0 0.0
    %672 = vmatpush1.msra.mxu0 0.0
    %673 = vmatprep.mubr.f32.mxu0 0.0
    %674 = vmatmul.mubr.f32.gmra.mrb[0].mxu0 %v607
    %v675 = vpop.f32.mrb[0].mxu0
    %v676 = vadd.f32 %v605, %v675
    %v677 = vpop.f32.mrb[0].mxu0
    %678 = vdwg.mxu0
    %v679 = vld [vmem:[%s2 + $0x40] sm:$0xff]
    %v680 = vld [vmem:[%s2 + $0x48] sm:$0xff]
    %v681 = vld [vmem:[%s2 + $0x50] sm:$0xff]
    %v682 = vld [vmem:[%s2 + $0x58] sm:$0xff]
    %v683 = vld [vmem:[%s5 + $0x5] sm:$0x1]
    %684 = vmatprep.subr.mxu0 0.0
    %685 = vmatpush1.msra.mxu0 %v679
    %686 = vmatprep.subr.mxu0 0.0
    %687 = vmatpush1.msra.mxu0 %v680
    %688 = vmatprep.subr.mxu0 0.0
    %689 = vmatpush1.msra.mxu0 %v681
    %690 = vmatprep.subr.mxu0 0.0
    %691 = vmatpush1.msra.mxu0 %v682
    %692 = vmatprep.subr.mxu0 0.0
    %693 = vmatpush1.msra.mxu0 0.0
    %694 = vmatprep.subr.mxu0 0.0
    %695 = vmatpush1.msra.mxu0 0.0
    %696 = vmatprep.subr.mxu0 0.0
    %697 = vmatpush1.msra.mxu0 0.0
    %698 = vmatprep.subr.mxu0 0.0
    %699 = vmatpush1.msra.mxu0 0.0
    %700 = vmatprep.subr.mxu0 0.0
    %701 = vmatpush1.msra.mxu0 0.0
    %702 = vmatprep.subr.mxu0 0.0
    %703 = vmatpush1.msra.mxu0 0.0
    %704 = vmatprep.subr.mxu0 0.0
    %705 = vmatpush1.msra.mxu0 0.0
    %706 = vmatprep.subr.mxu0 0.0
    %707 = vmatpush1.msra.mxu0 0.0
    %708 = vmatprep.subr.mxu0 0.0
    %709 = vmatpush1.msra.mxu0 0.0
    %710 = vmatprep.subr.mxu0 0.0
    %711 = vmatpush1.msra.mxu0 0.0
    %712 = vmatprep.subr.mxu0 0.0
    %713 = vmatpush1.msra.mxu0 0.0
    %714 = vmatprep.subr.mxu0 0.0
    %715 = vmatpush1.msra.mxu0 0.0
    %716 = vmatprep.subr.mxu0 0.0
    %717 = vmatpush1.msra.mxu0 0.0
    %718 = vmatprep.subr.mxu0 0.0
    %719 = vmatpush1.msra.mxu0 0.0
    %720 = vmatprep.subr.mxu0 0.0
    %721 = vmatpush1.msra.mxu0 0.0
    %722 = vmatprep.subr.mxu0 0.0
    %723 = vmatpush1.msra.mxu0 0.0
    %724 = vmatprep.subr.mxu0 0.0
    %725 = vmatpush1.msra.mxu0 0.0
    %726 = vmatprep.subr.mxu0 0.0
    %727 = vmatpush1.msra.mxu0 0.0
    %728 = vmatprep.subr.mxu0 0.0
    %729 = vmatpush1.msra.mxu0 0.0
    %730 = vmatprep.subr.mxu0 0.0
    %731 = vmatpush1.msra.mxu0 0.0
    %732 = vmatprep.subr.mxu0 0.0
    %733 = vmatpush1.msra.mxu0 0.0
    %734 = vmatprep.subr.mxu0 0.0
    %735 = vmatpush1.msra.mxu0 0.0
    %736 = vmatprep.subr.mxu0 0.0
    %737 = vmatpush1.msra.mxu0 0.0
    %738 = vmatprep.subr.mxu0 0.0
    %739 = vmatpush1.msra.mxu0 0.0
    %740 = vmatprep.subr.mxu0 0.0
    %741 = vmatpush1.msra.mxu0 0.0
    %742 = vmatprep.subr.mxu0 0.0
    %743 = vmatpush1.msra.mxu0 0.0
    %744 = vmatprep.subr.mxu0 0.0
    %745 = vmatpush1.msra.mxu0 0.0
    %746 = vmatprep.subr.mxu0 0.0
    %747 = vmatpush1.msra.mxu0 0.0
    %748 = vmatprep.mubr.f32.mxu0 0.0
    %749 = vmatmul.mubr.f32.gmra.mrb[0].mxu0 %v37
    %v750 = vpop.f32.mrb[0].mxu0
    %v751 = vadd.f32 %v683, %v750
    %v752 = vpop.f32.mrb[0].mxu0
    %753 = vdwg.mxu0
    %v754 = vadd.f32 %v676, %v751
    %v755 = vxor.u32 %v754, 2147483648
    %v756 = vmul.f32 %v755, 1.442695
    %v757 = vpow.pop %v756
    %v758 = vadd.f32 %v757, 1.0
    %v759 = vrcp.pop %v758
    %v760 = vmul.f32 1.0, %v759
    %762 = vrot.lane.b32.xlu0 %v751, 64
    %v763 = vpop.permute.xlu0 %762
    %v765 = vmul.f32 %v760, %v763
    %767 = vrot.lane.b32.xlu0 %v765, 64
    %v768 = vpop.permute.xlu0 %767
    %v770 = vadd.f32 %v676, %v768
    %v771 = vtanh.pop %v770
    %v772 = vsub.f32 1.0, %v760
    %774 = vrot.lane.b32.xlu0 %v771, 96
    %v775 = vpop.permute.xlu0 %774
    %v777 = vmul.f32 %v772, %v775
    %778 = vrot.lane.b32.xlu0 %v29, 32
    %v779 = vpop.permute.xlu0 %778
    %v781 = vmul.f32 %v760, %v779
    %v782 = vadd.f32 %v777, %v781
    %784 = vrot.lane.b32.xlu0 %v782, 96
    %v785 = vpop.permute.xlu0 %784
    %787 = vst.msk [vmem:[#allocation4] sm:$0x1] %vm111, %v785
    %v788 = vld [vmem:[%s4] sm:$0xff]
    %v789 = vld [vmem:[%s4 + $0x8] sm:$0xff]
    %v790 = vld [vmem:[%s4 + $0x10] sm:$0xff]
    %v791 = vld [vmem:[%s4 + $0x18] sm:$0xff]
    %v792 = vld [vmem:[%s4 + $0x20] sm:$0xff]
    %v793 = vld [vmem:[%s4 + $0x28] sm:$0xff]
    %v794 = vld [vmem:[%s4 + $0x30] sm:$0xff]
    %795 = vmatprep.subr.mxu0 0.0
    %796 = vmatpush1.msra.mxu0 %v792
    %797 = vmatprep.subr.mxu0 0.0
    %798 = vmatpush1.msra.mxu0 %v793
    %799 = vmatprep.subr.mxu0 0.0
    %800 = vmatpush1.msra.mxu0 %v794
    %801 = vmatprep.subr.mxu0 0.0
    %802 = vmatpush1.msra.mxu0 0.0
    %803 = vmatprep.subr.mxu0 0.0
    %804 = vmatpush1.msra.mxu0 0.0
    %805 = vmatprep.subr.mxu0 0.0
    %806 = vmatpush1.msra.mxu0 0.0
    %807 = vmatprep.subr.mxu0 0.0
    %808 = vmatpush1.msra.mxu0 0.0
    %809 = vmatprep.subr.mxu0 0.0
    %810 = vmatpush1.msra.mxu0 0.0
    %811 = vmatprep.subr.mxu0 0.0
    %812 = vmatpush1.msra.mxu0 0.0
    %813 = vmatprep.subr.mxu0 0.0
    %814 = vmatpush1.msra.mxu0 0.0
    %815 = vmatprep.subr.mxu0 0.0
    %816 = vmatpush1.msra.mxu0 0.0
    %817 = vmatprep.subr.mxu0 0.0
    %818 = vmatpush1.msra.mxu0 0.0
    %819 = vmatprep.subr.mxu0 0.0
    %820 = vmatpush1.msra.mxu0 0.0
    %821 = vmatprep.subr.mxu0 0.0
    %822 = vmatpush1.msra.mxu0 0.0
    %823 = vmatprep.subr.mxu0 0.0
    %824 = vmatpush1.msra.mxu0 0.0
    %825 = vmatprep.subr.mxu0 0.0
    %826 = vmatpush1.msra.mxu0 0.0
    %827 = vmatprep.subr.mxu0 0.0
    %828 = vmatpush1.msra.mxu0 0.0
    %829 = vmatprep.subr.mxu0 0.0
    %830 = vmatpush1.msra.mxu0 0.0
    %831 = vmatprep.subr.mxu0 0.0
    %832 = vmatpush1.msra.mxu0 0.0
    %833 = vmatprep.subr.mxu0 0.0
    %834 = vmatpush1.msra.mxu0 0.0
    %835 = vmatprep.subr.mxu0 0.0
    %836 = vmatpush1.msra.mxu0 0.0
    %837 = vmatprep.subr.mxu0 0.0
    %838 = vmatpush1.msra.mxu0 0.0
    %839 = vmatprep.subr.mxu0 0.0
    %840 = vmatpush1.msra.mxu0 0.0
    %841 = vmatprep.subr.mxu0 0.0
    %842 = vmatpush1.msra.mxu0 0.0
    %843 = vmatprep.subr.mxu0 0.0
    %844 = vmatpush1.msra.mxu0 0.0
    %845 = vmatprep.subr.mxu0 0.0
    %846 = vmatpush1.msra.mxu0 0.0
    %847 = vmatprep.subr.mxu0 0.0
    %848 = vmatpush1.msra.mxu0 0.0
    %849 = vmatprep.subr.mxu0 0.0
    %850 = vmatpush1.msra.mxu0 0.0
    %851 = vmatprep.subr.mxu0 0.0
    %852 = vmatpush1.msra.mxu0 0.0
    %853 = vmatprep.subr.mxu0 0.0
    %854 = vmatpush1.msra.mxu0 0.0
    %855 = vmatprep.subr.mxu0 0.0
    %856 = vmatpush1.msra.mxu0 0.0
    %857 = vmatprep.subr.mxu0 0.0
    %858 = vmatpush1.msra.mxu0 0.0
    %859 = vmatprep.mubr.f32.mxu0 0.0
    %860 = vmatmul.mubr.f32.gmra.mrb[0].mxu0 %v295
    %v861 = vpop.f32.mrb[0].mxu0
    %v862 = vadd.f32 0.0, %v861
    %v863 = vpop.f32.mrb[0].mxu0
    %864 = vdwg.mxu0
    %v865 = vsel %vm35, %v785, 0
    %867 = vmatprep.subr.mxu0 0.0
    %868 = vmatpush1.msra.mxu0 %v788
    %869 = vmatprep.subr.mxu0 0.0
    %870 = vmatpush1.msra.mxu0 %v789
    %871 = vmatprep.subr.mxu0 0.0
    %872 = vmatpush1.msra.mxu0 %v790
    %873 = vmatprep.subr.mxu0 0.0
    %874 = vmatpush1.msra.mxu0 %v791
    %875 = vmatprep.subr.mxu0 0.0
    %876 = vmatpush1.msra.mxu0 0.0
    %877 = vmatprep.subr.mxu0 0.0
    %878 = vmatpush1.msra.mxu0 0.0
    %879 = vmatprep.subr.mxu0 0.0
    %880 = vmatpush1.msra.mxu0 0.0
    %881 = vmatprep.subr.mxu0 0.0
    %882 = vmatpush1.msra.mxu0 0.0
    %883 = vmatprep.subr.mxu0 0.0
    %884 = vmatpush1.msra.mxu0 0.0
    %885 = vmatprep.subr.mxu0 0.0
    %886 = vmatpush1.msra.mxu0 0.0
    %887 = vmatprep.subr.mxu0 0.0
    %888 = vmatpush1.msra.mxu0 0.0
    %889 = vmatprep.subr.mxu0 0.0
    %890 = vmatpush1.msra.mxu0 0.0
    %891 = vmatprep.subr.mxu0 0.0
    %892 = vmatpush1.msra.mxu0 0.0
    %893 = vmatprep.subr.mxu0 0.0
    %894 = vmatpush1.msra.mxu0 0.0
    %895 = vmatprep.subr.mxu0 0.0
    %896 = vmatpush1.msra.mxu0 0.0
    %897 = vmatprep.subr.mxu0 0.0
    %898 = vmatpush1.msra.mxu0 0.0
    %899 = vmatprep.subr.mxu0 0.0
    %900 = vmatpush1.msra.mxu0 0.0
    %901 = vmatprep.subr.mxu0 0.0
    %902 = vmatpush1.msra.mxu0 0.0
    %903 = vmatprep.subr.mxu0 0.0
    %904 = vmatpush1.msra.mxu0 0.0
    %905 = vmatprep.subr.mxu0 0.0
    %906 = vmatpush1.msra.mxu0 0.0
    %907 = vmatprep.subr.mxu0 0.0
    %908 = vmatpush1.msra.mxu0 0.0
    %909 = vmatprep.subr.mxu0 0.0
    %910 = vmatpush1.msra.mxu0 0.0
    %911 = vmatprep.subr.mxu0 0.0
    %912 = vmatpush1.msra.mxu0 0.0
    %913 = vmatprep.subr.mxu0 0.0
    %914 = vmatpush1.msra.mxu0 0.0
    %915 = vmatprep.subr.mxu0 0.0
    %916 = vmatpush1.msra.mxu0 0.0
    %917 = vmatprep.subr.mxu0 0.0
    %918 = vmatpush1.msra.mxu0 0.0
    %919 = vmatprep.subr.mxu0 0.0
    %920 = vmatpush1.msra.mxu0 0.0
    %921 = vmatprep.subr.mxu0 0.0
    %922 = vmatpush1.msra.mxu0 0.0
    %923 = vmatprep.subr.mxu0 0.0
    %924 = vmatpush1.msra.mxu0 0.0
    %925 = vmatprep.subr.mxu0 0.0
    %926 = vmatpush1.msra.mxu0 0.0
    %927 = vmatprep.subr.mxu0 0.0
    %928 = vmatpush1.msra.mxu0 0.0
    %929 = vmatprep.subr.mxu0 0.0
    %930 = vmatpush1.msra.mxu0 0.0
    %931 = vmatprep.mubr.f32.mxu0 0.0
    %932 = vmatmul.mubr.f32.gmra.mrb[0].mxu0 %v865
    %v933 = vpop.f32.mrb[0].mxu0
    %v934 = vadd.f32 %v862, %v933
    %v935 = vpop.f32.mrb[0].mxu0
    %936 = vdwg.mxu0
    %v937 = vld [vmem:[%s5 + $0x6] sm:$0x1]
    %v938 = vadd.f32 %v934, %v937
    %vm939 = vcmask 122880
    %v940 = vsel %vm939, %v938, -inf
    %941 = vmax.xlane.f32.xlu0 %v940
    %v942 = vpop.xlane.xlu0 %941
    %v943 = vsub.f32 %v938, %v942
    %v944 = vmul.f32 %v943, 1.442695
    %v945 = vpow.pop %v944
    %v946 = vsel %vm939, %v945, 0.0
    %947 = vadd.xlane.f32.xlu0 %v946
    %v948 = vpop.xlane.xlu0 %947
    %v949 = vlog2.pop %v948
    %v950 = vmul.f32 %v949, 0.6931472
    %v951 = vadd.f32 %v950, %v942
    %v952 = vsub.f32 %v938, %v951
    %953 = vst.msk [vmem:[#allocation2] sm:$0x1] %vm939, %v952
    // Predicated region
    $region26: #{tpu_custom_call.1} parent=1 // pred_check
      _
    $region27: #{tpu_custom_call.1} parent=1 // pred_check_branch
      %955 = sbr.rel (0) target = $region29
    $region28: #{tpu_custom_call.1} parent=1 // pred_region
      %s957 = ssub.s32 16, 16
      %958 = vsyncadd [#allocation3], %s957
      %s960 = sshll.u32 [#allocation2], 4
      %s961 = int_to_ptr.vmem [resolvable:$true] %s960
      %963 = dma.vmem_to_hbm [thread:$0]  %s961, 16, %s6, [#allocation3]
    $region29: #{tpu_custom_call.1} parent=1 // pred_fallthru
      _
    // Predicated region
    $region30: #{tpu_custom_call.1} parent=1 // pred_check
      _
    $region31: #{tpu_custom_call.1} parent=1 // pred_check_branch
      %965 = sbr.rel (0) target = $region33
    $region32: #{tpu_custom_call.1} parent=1 // pred_region
      %s967 = ssub.s32 16, 16
      %968 = vsyncadd [#allocation5], %s967
      %s970 = sshll.u32 [#allocation4], 4
      %s971 = int_to_ptr.vmem [resolvable:$true] %s970
      %973 = dma.vmem_to_hbm [thread:$0]  %s971, 16, %s7, [#allocation5]
    $region33: #{tpu_custom_call.1} parent=1 // pred_fallthru
      _
    // Predicated region
    $region34: #{tpu_custom_call.1} parent=1 // pred_check
      _
    $region35: #{tpu_custom_call.1} parent=1 // pred_check_branch
      %975 = sbr.rel (0) target = $region37
    $region36: #{tpu_custom_call.1} parent=1 // pred_region
      %s977 = ssub.s32 16, 16
      %978 = vsyncadd [#allocation5], %s977
      %s980 = sshll.u32 [#allocation6], 4
      %s981 = int_to_ptr.vmem [resolvable:$true] %s980
      %983 = dma.vmem_to_hbm [thread:$0]  %s981, 16, %s8, [#allocation5]
    $region37: #{tpu_custom_call.1} parent=1 // pred_fallthru
      _
    // Predicated region
    $region38: #{tpu_custom_call.1} parent=1 // pred_check
      _
    $region39: #{tpu_custom_call.1} parent=1 // pred_check_branch
      %985 = sbr.rel (0) target = $region41
    $region40: #{tpu_custom_call.1} parent=1 // pred_region
      %986 = dma.done [#allocation3], 16
    $region41: #{tpu_custom_call.1} parent=1 // pred_fallthru
      _
    // Predicated region
    $region42: #{tpu_custom_call.1} parent=1 // pred_check
      _
    $region43: #{tpu_custom_call.1} parent=1 // pred_check_branch
      %988 = sbr.rel (0) target = $region45
    $region44: #{tpu_custom_call.1} parent=1 // pred_region
      %989 = dma.done [#allocation5], 16
    $region45: #{tpu_custom_call.1} parent=1 // pred_fallthru
      _
    // Predicated region
    $region46: #{tpu_custom_call.1} parent=1 // pred_check
      _
    $region47: #{tpu_custom_call.1} parent=1 // pred_check_branch
      %991 = sbr.rel (0) target = $region49
    $region48: #{tpu_custom_call.1} parent=1 // pred_region
      %992 = dma.done [#allocation5], 16
    $region49: #{tpu_custom_call.1} parent=1 // pred_fallthru
      _
    %993 = vsyncpa [#allocation3], 1
    %994 = vsyncpa [#allocation5], 1

</llo_original>
